<compile_context>
chip_gen: v7x
topology: tpu7x:2x2x1
jax: 0.10.0
libtpu: 0.0.40
codegen_flags: <defaults>
</compile_context>

<pallas_src>
import jax
import jax.numpy as jnp
import numpy as np
from jax.experimental import pallas as pl
from jax.experimental.pallas import tpu as pltpu


def _state_net_kernel(in_ref, w_in_ref, b0_ref, w1_ref, b1_ref,
                      w2_ref, bout_ref, o_ref):
    nx = o_ref.shape[0]
    in_t = in_ref[...]                                    # (n_in, tb)

    # Fused first stage: [skipT ; pre0T] = [W_skip^T ; W0^T] @ inT  (one matmul)
    comb = jnp.dot(w_in_ref[...], in_t,
                   preferred_element_type=jnp.float32)    # (nx + H, tb)
    skip_t = comb[:nx]                                    # (nx, tb)

    h = jnp.tanh(comb[nx:] + b0_ref[...])                 # (H, tb)
    h = jnp.tanh(jnp.dot(w1_ref[...], h,
                         preferred_element_type=jnp.float32) + b1_ref[...])

    out_t = (skip_t
             + jnp.dot(w2_ref[...], h, preferred_element_type=jnp.float32)
             + bout_ref[...])                             # b_skip + b2 folded
    o_ref[...] = out_t.astype(o_ref.dtype)


def default_state_net_forward(x, u, params, *, tile_b=2048):
    """x: (B, nx), u: (B, *nu)  ->  (B, nx)."""
    B, nx = x.shape
    u_flat = u.reshape(B, -1)                 # u.view(u.shape[0], -1)
    n_in = nx + u_flat.shape[1]

    # ---- Wrapper-side layout prep (feature-major / batch-in-lanes) ----------
    # net_in^T : (n_in, B)
    net_in_t = jnp.concatenate([x, u_flat], axis=1).T
    # Fuse skip + first hidden layer into one LHS weight: (nx + H, n_in).
    w_in_t = jnp.concatenate([params["w_skip"], params["w0"]], axis=1).T
    b0_t = params["b0"].T                     # (H, 1)
    w1_t = params["w1"].T                     # (H, H)
    b1_t = params["b1"].T                     # (H, 1)
    w2_t = params["w2"].T                     # (nx, H)
    b_out_t = (params["b_skip"] + params["b2"]).T   # (nx, 1)  (bias folding)

    weights = (w_in_t, b0_t, w1_t, b1_t, w2_t, b_out_t)

    if B <= tile_b:
        # Tiny batch: whole problem fits in VMEM. No grid, no pipelining
        # machinery, no double-buffered copies of the operands.
        vmem = pltpu.MemorySpace.VMEM
        out_t = pl.pallas_call(
            _state_net_kernel,
            out_shape=jax.ShapeDtypeStruct((nx, B), jnp.float32),
            in_specs=[pl.BlockSpec(memory_space=vmem)] * (1 + len(weights)),
            out_specs=pl.BlockSpec(memory_space=vmem),
        )(net_in_t, *weights)
        return out_t.T

    # ---- Large batch: tile the (lane-dense) batch axis ----------------------
    # Keep the batch tile a multiple of 128 lanes.
    tile_b = max(128, (tile_b // 128) * 128)
    grid = (pl.cdiv(B, tile_b),)              # ragged last tile handled by Pallas

    def stream_spec(nrows):
        # Stream along the batch (lane) axis; features (sublanes) full extent.
        return pl.BlockSpec((nrows, tile_b), lambda i: (0, i))

    def resident_spec(arr):
        # Weights/biases stay VMEM-resident across the whole grid.
        return pl.BlockSpec(arr.shape, lambda i: (0, 0))

    in_specs = [stream_spec(n_in)] + [resident_spec(w) for w in weights]
    out_spec = stream_spec(nx)

    out_t = pl.pallas_call(
        _state_net_kernel,
        out_shape=jax.ShapeDtypeStruct((nx, B), jnp.float32),
        grid=grid,
        in_specs=in_specs,
        out_specs=out_spec,
        compiler_params=pltpu.CompilerParams(
            dimension_semantics=("parallel",)),   # megacore sharding on v7x
    )(net_in_t, *weights)
    return out_t.T


def init_params(key, n_in, n_out, n_nodes):
    """PyTorch-Linear-style init (U(-k, k), k = 1/sqrt(fan_in)).
    Weights stored transposed: (in, out). Biases stored as (1, out)."""
    def linear(k, fan_in, fan_out):
        kw, kb = jax.random.split(k)
        bound = 1.0 / np.sqrt(fan_in)
        w = jax.random.uniform(kw, (fan_in, fan_out), jnp.float32, -bound, bound)
        b = jax.random.uniform(kb, (1, fan_out), jnp.float32, -bound, bound)
        return w, b

    k0, k1, k2, k3 = jax.random.split(key, 4)
    w_skip, b_skip = linear(k0, n_in, n_out)
    w0, b0 = linear(k1, n_in, n_nodes)
    w1, b1 = linear(k2, n_nodes, n_nodes)
    w2, b2 = linear(k3, n_nodes, n_out)
    return dict(w_skip=w_skip, b_skip=b_skip,
                w0=w0, b0=b0, w1=w1, b1=b1, w2=w2, b2=b2)


def reference_forward(x, u, p):
    net_in = jnp.concatenate([x, u.reshape(u.shape[0], -1)], axis=1)
    skip = net_in @ p["w_skip"] + p["b_skip"]
    h = jnp.tanh(net_in @ p["w0"] + p["b0"])
    h = jnp.tanh(h @ p["w1"] + p["b1"])
    return skip + (h @ p["w2"] + p["b2"])


if __name__ == "__main__":
    key = jax.random.PRNGKey(0)
    kx, ku, kp, kx2, ku2, kx3, ku3 = jax.random.split(key, 7)

    # Small shapes consistent with the module defaults.
    B, nx, nu = 8, 8, 3
    n_nodes_per_layer = 64          # n_hidden_layers = 2 (hard-wired in kernel)
    n_in = nx + nu
    params = init_params(kp, n_in, nx, n_nodes_per_layer)

    # 1) Tiny-batch (no-grid) path.
    x = jax.random.normal(kx, (B, nx), jnp.float32)
    u = jax.random.normal(ku, (B, nu), jnp.float32)
    out = jax.block_until_ready(default_state_net_forward(x, u, params))
    ref = reference_forward(x, u, params)
    np.testing.assert_allclose(np.asarray(out), np.asarray(ref),
                               rtol=1e-4, atol=1e-5)

    # 2) Batch-tiled path, evenly divisible grid (multi-step).
    B2 = 512
    x2 = jax.random.normal(kx2, (B2, nx), jnp.float32)
    u2 = jax.random.normal(ku2, (B2, nu), jnp.float32)
    out2 = jax.block_until_ready(
        default_state_net_forward(x2, u2, params, tile_b=128))
    ref2 = reference_forward(x2, u2, params)
    np.testing.assert_allclose(np.asarray(out2), np.asarray(ref2),
                               rtol=1e-4, atol=1e-5)

    # 3) Batch-tiled path with a ragged last tile (B % tile_b != 0).
    B3 = 300
    x3 = jax.random.normal(kx3, (B3, nx), jnp.float32)
    u3 = jax.random.normal(ku3, (B3, nu), jnp.float32)
    out3 = jax.block_until_ready(
        default_state_net_forward(x3, u3, params, tile_b=128))
    ref3 = reference_forward(x3, u3, params)
    np.testing.assert_allclose(np.asarray(out3), np.asarray(ref3),
                               rtol=1e-4, atol=1e-5)

    print("KERNEL_OK")
</pallas_src>

<mosaic_0001>
module attributes {stable_mosaic.version = 11 : i64} {
  func.func @_state_net_kernel(%arg0: memref<11x8xf32, #tpu.memory_space<vmem>>, %arg1: memref<72x11xf32, #tpu.memory_space<vmem>>, %arg2: memref<64x1xf32, #tpu.memory_space<vmem>>, %arg3: memref<64x64xf32, #tpu.memory_space<vmem>>, %arg4: memref<64x1xf32, #tpu.memory_space<vmem>>, %arg5: memref<8x64xf32, #tpu.memory_space<vmem>>, %arg6: memref<8x1xf32, #tpu.memory_space<vmem>>, %arg7: memref<8x8xf32, #tpu.memory_space<vmem>>) attributes {dimension_semantics = [], scalar_prefetch = 0 : i64, scratch_operands = 0 : i64, tpu.core_type = #tpu.core_type<tc>} {
    %c0 = arith.constant 0 : index
    %c0_0 = arith.constant 0 : index
    %0 = vector.load %arg0[%c0, %c0_0] : memref<11x8xf32, #tpu.memory_space<vmem>>, vector<11x8xf32>
    %c0_1 = arith.constant 0 : index
    %c0_2 = arith.constant 0 : index
    %1 = vector.load %arg1[%c0_1, %c0_2] : memref<72x11xf32, #tpu.memory_space<vmem>>, vector<72x11xf32>
    %cst = arith.constant dense<0.000000e+00> : vector<72x8xf32>
    %2 = tpu.matmul %1, %0, %cst {dimension_numbers = #tpu.dot_dimension_numbers<[1], [0], [0], [1], [0, 0, 1, 1], [], []>} : vector<72x11xf32>, vector<11x8xf32>, vector<72x8xf32> -> vector<72x8xf32>
    %3 = vector.extract_strided_slice %2 {offsets = [0, 0], sizes = [8, 8], strides = [1, 1]} : vector<72x8xf32> to vector<8x8xf32>
    %4 = vector.extract_strided_slice %2 {offsets = [8, 0], sizes = [64, 8], strides = [1, 1]} : vector<72x8xf32> to vector<64x8xf32>
    %c0_3 = arith.constant 0 : index
    %c0_4 = arith.constant 0 : index
    %5 = vector.load %arg2[%c0_3, %c0_4] : memref<64x1xf32, #tpu.memory_space<vmem>>, vector<64x1xf32>
    %6 = vector.broadcast %5 : vector<64x1xf32> to vector<64x8xf32>
    %7 = arith.addf %4, %6 : vector<64x8xf32>
    %8 = math.tanh %7 : vector<64x8xf32>
    %c0_5 = arith.constant 0 : index
    %c0_6 = arith.constant 0 : index
    %9 = vector.load %arg3[%c0_5, %c0_6] : memref<64x64xf32, #tpu.memory_space<vmem>>, vector<64x64xf32>
    %cst_7 = arith.constant dense<0.000000e+00> : vector<64x8xf32>
    %10 = tpu.matmul %9, %8, %cst_7 {dimension_numbers = #tpu.dot_dimension_numbers<[1], [0], [0], [1], [0, 0, 1, 1], [], []>} : vector<64x64xf32>, vector<64x8xf32>, vector<64x8xf32> -> vector<64x8xf32>
    %c0_8 = arith.constant 0 : index
    %c0_9 = arith.constant 0 : index
    %11 = vector.load %arg4[%c0_8, %c0_9] : memref<64x1xf32, #tpu.memory_space<vmem>>, vector<64x1xf32>
    %12 = vector.broadcast %11 : vector<64x1xf32> to vector<64x8xf32>
    %13 = arith.addf %10, %12 : vector<64x8xf32>
    %14 = math.tanh %13 : vector<64x8xf32>
    %c0_10 = arith.constant 0 : index
    %c0_11 = arith.constant 0 : index
    %15 = vector.load %arg5[%c0_10, %c0_11] : memref<8x64xf32, #tpu.memory_space<vmem>>, vector<8x64xf32>
    %cst_12 = arith.constant dense<0.000000e+00> : vector<8x8xf32>
    %16 = tpu.matmul %15, %14, %cst_12 {dimension_numbers = #tpu.dot_dimension_numbers<[1], [0], [0], [1], [0, 0, 1, 1], [], []>} : vector<8x64xf32>, vector<64x8xf32>, vector<8x8xf32> -> vector<8x8xf32>
    %17 = arith.addf %3, %16 : vector<8x8xf32>
    %c0_13 = arith.constant 0 : index
    %c0_14 = arith.constant 0 : index
    %18 = vector.load %arg6[%c0_13, %c0_14] : memref<8x1xf32, #tpu.memory_space<vmem>>, vector<8x1xf32>
    %19 = vector.broadcast %18 : vector<8x1xf32> to vector<8x8xf32>
    %20 = arith.addf %17, %19 : vector<8x8xf32>
    %c0_15 = arith.constant 0 : index
    %c0_16 = arith.constant 0 : index
    %21 = vector.load %arg7[%c0_15, %c0_16] : memref<8x8xf32, #tpu.memory_space<vmem>>, vector<8x8xf32>
    tpu.vector_store %arg7[%c0_15, %c0_16], %20 {strides = array<i32>} : memref<8x8xf32, #tpu.memory_space<vmem>>, vector<8x8xf32>,
    return
  }
}

</mosaic_0001>

<llo_original>
// kernel: tpu_custom_call.1
$region0: #{tpu_custom_call.1}
  #allocation0 [shape = 'u32[]', space=smem, size = 0x4, offset = 0x4, fixed_abs, tag = 'smem constant byte address 0x4 - core index']
  #allocation1 [shape = 'u32[144,128]{1,0:T(1,128)}', space=vmem, size = 0x12000, scoped, tag = 'internal scratch']
  %s0 = inlined_call_operand.vmem [shape: f32[11,8], index: 0, kind: input, shape index: {}]
  %s1 = inlined_call_operand.vmem [shape: f32[72,11], index: 1, kind: input, shape index: {}]
  %s2 = inlined_call_operand.vmem [shape: f32[64,1], index: 2, kind: input, shape index: {}]
  %s3 = inlined_call_operand.vmem [shape: f32[64,64], index: 3, kind: input, shape index: {}]
  %s4 = inlined_call_operand.vmem [shape: f32[64,1], index: 4, kind: input, shape index: {}]
  %s5 = inlined_call_operand.vmem [shape: f32[8,64], index: 5, kind: input, shape index: {}]
  %s6 = inlined_call_operand.vmem [shape: f32[8,1], index: 6, kind: input, shape index: {}]
  %s7 = inlined_call_operand.hbm [shape: f32[8,8], index: 7, kind: output, shape index: {}]
  %s8 = sld [smem:[#allocation0]]
  $region38: #{tpu_custom_call.1} parent=0
    _
  %s10 = ssub.s32 1, %s8
  %s11 = scalar_select 0, %s10, %s8
  $region1: #{tpu_custom_call.1} parent=0
    #allocation2 [shape = 'u8[4096]{0}', space=vmem, size = 0x1000, scoped, tag = 'output window, operand 0, single buffered']
    #allocation3 [shape = 's32[1]{0}', space=sflag, size = 0x4, scoped, tag = 'scoped memory for tpu_custom_call.1']
    %12 = vsyncpa [#allocation3], 0
    // Predicated region
    $region2: #{tpu_custom_call.1} parent=1 // pred_check
      _
    $region3: #{tpu_custom_call.1} parent=1 // pred_check_branch
      %14 = sbr.rel (0) target = $region5
    $region4: #{tpu_custom_call.1} parent=1 // pred_region
      _
    $region5: #{tpu_custom_call.1} parent=1 // pred_fallthru
      _
    // Predicated region
    $region6: #{tpu_custom_call.1} parent=1 // pred_check
      _
    $region7: #{tpu_custom_call.1} parent=1 // pred_check_branch
      %16 = sbr.rel (0) target = $region9
    $region8: #{tpu_custom_call.1} parent=1 // pred_region
      _
    $region9: #{tpu_custom_call.1} parent=1 // pred_fallthru
      _
    // Predicated region
    $region10: #{tpu_custom_call.1} parent=1 // pred_check
      _
    $region11: #{tpu_custom_call.1} parent=1 // pred_check_branch
      %18 = sbr.rel (0) target = $region13
    $region12: #{tpu_custom_call.1} parent=1 // pred_region
      _
    $region13: #{tpu_custom_call.1} parent=1 // pred_fallthru
      _
    // Predicated region
    $region14: #{tpu_custom_call.1} parent=1 // pred_check
      _
    $region15: #{tpu_custom_call.1} parent=1 // pred_check_branch
      %20 = sbr.rel (0) target = $region17
    $region16: #{tpu_custom_call.1} parent=1 // pred_region
      _
    $region17: #{tpu_custom_call.1} parent=1 // pred_fallthru
      _
    // Predicated region
    $region18: #{tpu_custom_call.1} parent=1 // pred_check
      _
    $region19: #{tpu_custom_call.1} parent=1 // pred_check_branch
      %22 = sbr.rel (0) target = $region21
    $region20: #{tpu_custom_call.1} parent=1 // pred_region
      _
    $region21: #{tpu_custom_call.1} parent=1 // pred_fallthru
      _
    // Predicated region
    $region22: #{tpu_custom_call.1} parent=1 // pred_check
      _
    $region23: #{tpu_custom_call.1} parent=1 // pred_check_branch
      %24 = sbr.rel (0) target = $region25
    $region24: #{tpu_custom_call.1} parent=1 // pred_region
      _
    $region25: #{tpu_custom_call.1} parent=1 // pred_fallthru
      _
    // Predicated region
    $region26: #{tpu_custom_call.1} parent=1 // pred_check
      _
    $region27: #{tpu_custom_call.1} parent=1 // pred_check_branch
      %26 = sbr.rel (0) target = $region29
    $region28: #{tpu_custom_call.1} parent=1 // pred_region
      _
    $region29: #{tpu_custom_call.1} parent=1 // pred_fallthru
      _
    %v27 = vld [vmem:[%s0] sm:$0xff]
    %v28 = vld [vmem:[%s0 + $0x8] sm:$0x7]
    %v29 = vld [vmem:[%s1] sm:$0xff]
    %v30 = vld [vmem:[%s1 + $0x8] sm:$0xff]
    %v31 = vld [vmem:[%s1 + $0x10] sm:$0xff]
    %v32 = vld [vmem:[%s1 + $0x18] sm:$0xff]
    %v33 = vld [vmem:[%s1 + $0x20] sm:$0xff]
    %v34 = vld [vmem:[%s1 + $0x28] sm:$0xff]
    %v35 = vld [vmem:[%s1 + $0x30] sm:$0xff]
    %v36 = vld [vmem:[%s1 + $0x38] sm:$0xff]
    %v37 = vld [vmem:[%s1 + $0x40] sm:$0xff]
    %vm38 = vcmask 89088
    %v40 = vsel %vm38, %v29, 0
    %v43 = vsel %vm38, %v30, 0
    %v46 = vsel %vm38, %v31, 0
    %v49 = vsel %vm38, %v32, 0
    %v52 = vsel %vm38, %v33, 0
    %v55 = vsel %vm38, %v34, 0
    %v58 = vsel %vm38, %v35, 0
    %v61 = vsel %vm38, %v36, 0
    %v64 = vsel %vm38, %v37, 0
    %vm66 = vcmask 1042432
    %v68 = vsel %vm66, %v28, 0
    %70 = vmatprep.subr.mxu0 0.0
    %71 = vmatpush1.msra.mxu0 %v27
    %72 = vmatprep.subr.mxu0 0.0
    %73 = vmatpush1.msra.mxu0 %v68
    %74 = vmatprep.subr.mxu0 0.0
    %75 = vmatpush1.msra.mxu0 0.0
    %76 = vmatprep.subr.mxu0 0.0
    %77 = vmatpush1.msra.mxu0 0.0
    %78 = vmatprep.subr.mxu0 0.0
    %79 = vmatpush1.msra.mxu0 0.0
    %80 = vmatprep.subr.mxu0 0.0
    %81 = vmatpush1.msra.mxu0 0.0
    %82 = vmatprep.subr.mxu0 0.0
    %83 = vmatpush1.msra.mxu0 0.0
    %84 = vmatprep.subr.mxu0 0.0
    %85 = vmatpush1.msra.mxu0 0.0
    %86 = vmatprep.subr.mxu0 0.0
    %87 = vmatpush1.msra.mxu0 0.0
    %88 = vmatprep.subr.mxu0 0.0
    %89 = vmatpush1.msra.mxu0 0.0
    %90 = vmatprep.subr.mxu0 0.0
    %91 = vmatpush1.msra.mxu0 0.0
    %92 = vmatprep.subr.mxu0 0.0
    %93 = vmatpush1.msra.mxu0 0.0
    %94 = vmatprep.subr.mxu0 0.0
    %95 = vmatpush1.msra.mxu0 0.0
    %96 = vmatprep.subr.mxu0 0.0
    %97 = vmatpush1.msra.mxu0 0.0
    %98 = vmatprep.subr.mxu0 0.0
    %99 = vmatpush1.msra.mxu0 0.0
    %100 = vmatprep.subr.mxu0 0.0
    %101 = vmatpush1.msra.mxu0 0.0
    %102 = vmatprep.subr.mxu0 0.0
    %103 = vmatpush1.msra.mxu0 0.0
    %104 = vmatprep.subr.mxu0 0.0
    %105 = vmatpush1.msra.mxu0 0.0
    %106 = vmatprep.subr.mxu0 0.0
    %107 = vmatpush1.msra.mxu0 0.0
    %108 = vmatprep.subr.mxu0 0.0
    %109 = vmatpush1.msra.mxu0 0.0
    %110 = vmatprep.subr.mxu0 0.0
    %111 = vmatpush1.msra.mxu0 0.0
    %112 = vmatprep.subr.mxu0 0.0
    %113 = vmatpush1.msra.mxu0 0.0
    %114 = vmatprep.subr.mxu0 0.0
    %115 = vmatpush1.msra.mxu0 0.0
    %116 = vmatprep.subr.mxu0 0.0
    %117 = vmatpush1.msra.mxu0 0.0
    %118 = vmatprep.subr.mxu0 0.0
    %119 = vmatpush1.msra.mxu0 0.0
    %120 = vmatprep.subr.mxu0 0.0
    %121 = vmatpush1.msra.mxu0 0.0
    %122 = vmatprep.subr.mxu0 0.0
    %123 = vmatpush1.msra.mxu0 0.0
    %124 = vmatprep.subr.mxu0 0.0
    %125 = vmatpush1.msra.mxu0 0.0
    %126 = vmatprep.subr.mxu0 0.0
    %127 = vmatpush1.msra.mxu0 0.0
    %128 = vmatprep.subr.mxu0 0.0
    %129 = vmatpush1.msra.mxu0 0.0
    %130 = vmatprep.subr.mxu0 0.0
    %131 = vmatpush1.msra.mxu0 0.0
    %132 = vmatprep.subr.mxu0 0.0
    %133 = vmatpush1.msra.mxu0 0.0
    %134 = vmatprep.mubr.f32.mxu0 0.0
    %135 = vmatmul.mubr.f32.gmra.mrb[0].mxu0 %v40
    %v136 = vpop.f32.mrb[0].mxu0
    %v137 = vadd.f32 0.0, %v136
    %v138 = vpop.f32.mrb[0].mxu0
    %139 = vmatprep.mubr.f32.mxu0 0.0
    %140 = vmatmul.mubr.f32.gmra.mrb[0].mxu0 %v43
    %v141 = vpop.f32.mrb[0].mxu0
    %v142 = vadd.f32 0.0, %v141
    %v143 = vpop.f32.mrb[0].mxu0
    %144 = vmatprep.mubr.f32.mxu0 0.0
    %145 = vmatmul.mubr.f32.gmra.mrb[0].mxu0 %v46
    %v146 = vpop.f32.mrb[0].mxu0
    %v147 = vadd.f32 0.0, %v146
    %v148 = vpop.f32.mrb[0].mxu0
    %149 = vmatprep.mubr.f32.mxu0 0.0
    %150 = vmatmul.mubr.f32.gmra.mrb[0].mxu0 %v49
    %v151 = vpop.f32.mrb[0].mxu0
    %v152 = vadd.f32 0.0, %v151
    %v153 = vpop.f32.mrb[0].mxu0
    %154 = vmatprep.mubr.f32.mxu0 0.0
    %155 = vmatmul.mubr.f32.gmra.mrb[0].mxu0 %v52
    %v156 = vpop.f32.mrb[0].mxu0
    %v157 = vadd.f32 0.0, %v156
    %v158 = vpop.f32.mrb[0].mxu0
    %159 = vmatprep.mubr.f32.mxu0 0.0
    %160 = vmatmul.mubr.f32.gmra.mrb[0].mxu0 %v55
    %v161 = vpop.f32.mrb[0].mxu0
    %v162 = vadd.f32 0.0, %v161
    %v163 = vpop.f32.mrb[0].mxu0
    %164 = vmatprep.mubr.f32.mxu0 0.0
    %165 = vmatmul.mubr.f32.gmra.mrb[0].mxu0 %v58
    %v166 = vpop.f32.mrb[0].mxu0
    %v167 = vadd.f32 0.0, %v166
    %v168 = vpop.f32.mrb[0].mxu0
    %169 = vmatprep.mubr.f32.mxu0 0.0
    %170 = vmatmul.mubr.f32.gmra.mrb[0].mxu0 %v61
    %v171 = vpop.f32.mrb[0].mxu0
    %v172 = vadd.f32 0.0, %v171
    %v173 = vpop.f32.mrb[0].mxu0
    %174 = vmatprep.mubr.f32.mxu0 0.0
    %175 = vmatmul.mubr.f32.gmra.mrb[0].mxu0 %v64
    %v176 = vpop.f32.mrb[0].mxu0
    %v177 = vadd.f32 0.0, %v176
    %v178 = vpop.f32.mrb[0].mxu0
    %179 = vdwg.mxu0
    %v180 = vld [vmem:[%s2] sm:$0xff]
    %v181 = vld [vmem:[%s2 + $0x8] sm:$0xff]
    %v182 = vld [vmem:[%s2 + $0x10] sm:$0xff]
    %v183 = vld [vmem:[%s2 + $0x18] sm:$0xff]
    %v184 = vld [vmem:[%s2 + $0x20] sm:$0xff]
    %v185 = vld [vmem:[%s2 + $0x28] sm:$0xff]
    %v186 = vld [vmem:[%s2 + $0x30] sm:$0xff]
    %v187 = vld [vmem:[%s2 + $0x38] sm:$0xff]
    %189 = vset.pattern.permute.xlu0 0
    %190 = vperm.xlu0 %189, %v180
    %v191 = vpop.permute.xlu0 %190
    %194 = vset.pattern.permute.xlu0 0
    %195 = vperm.xlu0 %194, %v181
    %v196 = vpop.permute.xlu0 %195
    %199 = vset.pattern.permute.xlu0 0
    %200 = vperm.xlu0 %199, %v182
    %v201 = vpop.permute.xlu0 %200
    %204 = vset.pattern.permute.xlu0 0
    %205 = vperm.xlu0 %204, %v183
    %v206 = vpop.permute.xlu0 %205
    %209 = vset.pattern.permute.xlu0 0
    %210 = vperm.xlu0 %209, %v184
    %v211 = vpop.permute.xlu0 %210
    %214 = vset.pattern.permute.xlu0 0
    %215 = vperm.xlu0 %214, %v185
    %v216 = vpop.permute.xlu0 %215
    %219 = vset.pattern.permute.xlu0 0
    %220 = vperm.xlu0 %219, %v186
    %v221 = vpop.permute.xlu0 %220
    %224 = vset.pattern.permute.xlu0 0
    %225 = vperm.xlu0 %224, %v187
    %v226 = vpop.permute.xlu0 %225
    %v228 = vadd.f32 %v142, %v191
    %v229 = vadd.f32 %v147, %v196
    %v230 = vadd.f32 %v152, %v201
    %v231 = vadd.f32 %v157, %v206
    %v232 = vadd.f32 %v162, %v211
    %v233 = vadd.f32 %v167, %v216
    %v234 = vadd.f32 %v172, %v221
    %v235 = vadd.f32 %v177, %v226
    %v236 = vtanh.pop %v228
    %v237 = vtanh.pop %v229
    %v238 = vtanh.pop %v230
    %v239 = vtanh.pop %v231
    %v240 = vtanh.pop %v232
    %v241 = vtanh.pop %v233
    %v242 = vtanh.pop %v234
    %v243 = vtanh.pop %v235
    %v244 = vld [vmem:[%s3] sm:$0xff]
    %v245 = vld [vmem:[%s3 + $0x8] sm:$0xff]
    %v246 = vld [vmem:[%s3 + $0x10] sm:$0xff]
    %v247 = vld [vmem:[%s3 + $0x18] sm:$0xff]
    %v248 = vld [vmem:[%s3 + $0x20] sm:$0xff]
    %v249 = vld [vmem:[%s3 + $0x28] sm:$0xff]
    %v250 = vld [vmem:[%s3 + $0x30] sm:$0xff]
    %v251 = vld [vmem:[%s3 + $0x38] sm:$0xff]
    %v252 = vld [vmem:[%s4] sm:$0xff]
    %v253 = vld [vmem:[%s4 + $0x8] sm:$0xff]
    %v254 = vld [vmem:[%s4 + $0x10] sm:$0xff]
    %v255 = vld [vmem:[%s4 + $0x18] sm:$0xff]
    %v256 = vld [vmem:[%s4 + $0x20] sm:$0xff]
    %v257 = vld [vmem:[%s4 + $0x28] sm:$0xff]
    %v258 = vld [vmem:[%s4 + $0x30] sm:$0xff]
    %v259 = vld [vmem:[%s4 + $0x38] sm:$0xff]
    %261 = vset.pattern.permute.xlu0 0
    %262 = vperm.xlu0 %261, %v252
    %v263 = vpop.permute.xlu0 %262
    %266 = vset.pattern.permute.xlu0 0
    %267 = vperm.xlu0 %266, %v253
    %v268 = vpop.permute.xlu0 %267
    %271 = vset.pattern.permute.xlu0 0
    %272 = vperm.xlu0 %271, %v254
    %v273 = vpop.permute.xlu0 %272
    %276 = vset.pattern.permute.xlu0 0
    %277 = vperm.xlu0 %276, %v255
    %v278 = vpop.permute.xlu0 %277
    %281 = vset.pattern.permute.xlu0 0
    %282 = vperm.xlu0 %281, %v256
    %v283 = vpop.permute.xlu0 %282
    %286 = vset.pattern.permute.xlu0 0
    %287 = vperm.xlu0 %286, %v257
    %v288 = vpop.permute.xlu0 %287
    %291 = vset.pattern.permute.xlu0 0
    %292 = vperm.xlu0 %291, %v258
    %v293 = vpop.permute.xlu0 %292
    %296 = vset.pattern.permute.xlu0 0
    %297 = vperm.xlu0 %296, %v259
    %v298 = vpop.permute.xlu0 %297
    %vm300 = vcmask 523264
    %v302 = vsel %vm300, %v244, 0
    %v305 = vsel %vm300, %v245, 0
    %v308 = vsel %vm300, %v246, 0
    %v311 = vsel %vm300, %v247, 0
    %v314 = vsel %vm300, %v248, 0
    %v317 = vsel %vm300, %v249, 0
    %v320 = vsel %vm300, %v250, 0
    %v323 = vsel %vm300, %v251, 0
    %325 = vmatprep.subr.mxu0 0.0
    %326 = vmatpush1.msra.mxu0 %v236
    %327 = vmatprep.subr.mxu0 0.0
    %328 = vmatpush1.msra.mxu0 %v237
    %329 = vmatprep.subr.mxu0 0.0
    %330 = vmatpush1.msra.mxu0 %v238
    %331 = vmatprep.subr.mxu0 0.0
    %332 = vmatpush1.msra.mxu0 %v239
    %333 = vmatprep.subr.mxu0 0.0
    %334 = vmatpush1.msra.mxu0 %v240
    %335 = vmatprep.subr.mxu0 0.0
    %336 = vmatpush1.msra.mxu0 %v241
    %337 = vmatprep.subr.mxu0 0.0
    %338 = vmatpush1.msra.mxu0 %v242
    %339 = vmatprep.subr.mxu0 0.0
    %340 = vmatpush1.msra.mxu0 %v243
    %341 = vmatprep.subr.mxu0 0.0
    %342 = vmatpush1.msra.mxu0 0.0
    %343 = vmatprep.subr.mxu0 0.0
    %344 = vmatpush1.msra.mxu0 0.0
    %345 = vmatprep.subr.mxu0 0.0
    %346 = vmatpush1.msra.mxu0 0.0
    %347 = vmatprep.subr.mxu0 0.0
    %348 = vmatpush1.msra.mxu0 0.0
    %349 = vmatprep.subr.mxu0 0.0
    %350 = vmatpush1.msra.mxu0 0.0
    %351 = vmatprep.subr.mxu0 0.0
    %352 = vmatpush1.msra.mxu0 0.0
    %353 = vmatprep.subr.mxu0 0.0
    %354 = vmatpush1.msra.mxu0 0.0
    %355 = vmatprep.subr.mxu0 0.0
    %356 = vmatpush1.msra.mxu0 0.0
    %357 = vmatprep.subr.mxu0 0.0
    %358 = vmatpush1.msra.mxu0 0.0
    %359 = vmatprep.subr.mxu0 0.0
    %360 = vmatpush1.msra.mxu0 0.0
    %361 = vmatprep.subr.mxu0 0.0
    %362 = vmatpush1.msra.mxu0 0.0
    %363 = vmatprep.subr.mxu0 0.0
    %364 = vmatpush1.msra.mxu0 0.0
    %365 = vmatprep.subr.mxu0 0.0
    %366 = vmatpush1.msra.mxu0 0.0
    %367 = vmatprep.subr.mxu0 0.0
    %368 = vmatpush1.msra.mxu0 0.0
    %369 = vmatprep.subr.mxu0 0.0
    %370 = vmatpush1.msra.mxu0 0.0
    %371 = vmatprep.subr.mxu0 0.0
    %372 = vmatpush1.msra.mxu0 0.0
    %373 = vmatprep.subr.mxu0 0.0
    %374 = vmatpush1.msra.mxu0 0.0
    %375 = vmatprep.subr.mxu0 0.0
    %376 = vmatpush1.msra.mxu0 0.0
    %377 = vmatprep.subr.mxu0 0.0
    %378 = vmatpush1.msra.mxu0 0.0
    %379 = vmatprep.subr.mxu0 0.0
    %380 = vmatpush1.msra.mxu0 0.0
    %381 = vmatprep.subr.mxu0 0.0
    %382 = vmatpush1.msra.mxu0 0.0
    %383 = vmatprep.subr.mxu0 0.0
    %384 = vmatpush1.msra.mxu0 0.0
    %385 = vmatprep.subr.mxu0 0.0
    %386 = vmatpush1.msra.mxu0 0.0
    %387 = vmatprep.subr.mxu0 0.0
    %388 = vmatpush1.msra.mxu0 0.0
    %389 = vmatprep.mubr.f32.mxu0 0.0
    %390 = vmatmul.mubr.f32.gmra.mrb[0].mxu0 %v302
    %v391 = vpop.f32.mrb[0].mxu0
    %v392 = vadd.f32 %v263, %v391
    %v393 = vpop.f32.mrb[0].mxu0
    %394 = vmatprep.mubr.f32.mxu0 0.0
    %395 = vmatmul.mubr.f32.gmra.mrb[0].mxu0 %v305
    %v396 = vpop.f32.mrb[0].mxu0
    %v397 = vadd.f32 %v268, %v396
    %v398 = vpop.f32.mrb[0].mxu0
    %399 = vmatprep.mubr.f32.mxu0 0.0
    %400 = vmatmul.mubr.f32.gmra.mrb[0].mxu0 %v308
    %v401 = vpop.f32.mrb[0].mxu0
    %v402 = vadd.f32 %v273, %v401
    %v403 = vpop.f32.mrb[0].mxu0
    %404 = vmatprep.mubr.f32.mxu0 0.0
    %405 = vmatmul.mubr.f32.gmra.mrb[0].mxu0 %v311
    %v406 = vpop.f32.mrb[0].mxu0
    %v407 = vadd.f32 %v278, %v406
    %v408 = vpop.f32.mrb[0].mxu0
    %409 = vmatprep.mubr.f32.mxu0 0.0
    %410 = vmatmul.mubr.f32.gmra.mrb[0].mxu0 %v314
    %v411 = vpop.f32.mrb[0].mxu0
    %v412 = vadd.f32 %v283, %v411
    %v413 = vpop.f32.mrb[0].mxu0
    %414 = vmatprep.mubr.f32.mxu0 0.0
    %415 = vmatmul.mubr.f32.gmra.mrb[0].mxu0 %v317
    %v416 = vpop.f32.mrb[0].mxu0
    %v417 = vadd.f32 %v288, %v416
    %v418 = vpop.f32.mrb[0].mxu0
    %419 = vmatprep.mubr.f32.mxu0 0.0
    %420 = vmatmul.mubr.f32.gmra.mrb[0].mxu0 %v320
    %v421 = vpop.f32.mrb[0].mxu0
    %v422 = vadd.f32 %v293, %v421
    %v423 = vpop.f32.mrb[0].mxu0
    %424 = vmatprep.mubr.f32.mxu0 0.0
    %425 = vmatmul.mubr.f32.gmra.mrb[0].mxu0 %v323
    %v426 = vpop.f32.mrb[0].mxu0
    %v427 = vadd.f32 %v298, %v426
    %v428 = vpop.f32.mrb[0].mxu0
    %429 = vdwg.mxu0
    %v430 = vtanh.pop %v392
    %v431 = vtanh.pop %v397
    %v432 = vtanh.pop %v402
    %v433 = vtanh.pop %v407
    %v434 = vtanh.pop %v412
    %v435 = vtanh.pop %v417
    %v436 = vtanh.pop %v422
    %v437 = vtanh.pop %v427
    %v438 = vld [vmem:[%s5] sm:$0xff]
    %v440 = vsel %vm300, %v438, 0
    %442 = vmatprep.subr.mxu0 0.0
    %443 = vmatpush1.msra.mxu0 %v430
    %444 = vmatprep.subr.mxu0 0.0
    %445 = vmatpush1.msra.mxu0 %v431
    %446 = vmatprep.subr.mxu0 0.0
    %447 = vmatpush1.msra.mxu0 %v432
    %448 = vmatprep.subr.mxu0 0.0
    %449 = vmatpush1.msra.mxu0 %v433
    %450 = vmatprep.subr.mxu0 0.0
    %451 = vmatpush1.msra.mxu0 %v434
    %452 = vmatprep.subr.mxu0 0.0
    %453 = vmatpush1.msra.mxu0 %v435
    %454 = vmatprep.subr.mxu0 0.0
    %455 = vmatpush1.msra.mxu0 %v436
    %456 = vmatprep.subr.mxu0 0.0
    %457 = vmatpush1.msra.mxu0 %v437
    %458 = vmatprep.subr.mxu0 0.0
    %459 = vmatpush1.msra.mxu0 0.0
    %460 = vmatprep.subr.mxu0 0.0
    %461 = vmatpush1.msra.mxu0 0.0
    %462 = vmatprep.subr.mxu0 0.0
    %463 = vmatpush1.msra.mxu0 0.0
    %464 = vmatprep.subr.mxu0 0.0
    %465 = vmatpush1.msra.mxu0 0.0
    %466 = vmatprep.subr.mxu0 0.0
    %467 = vmatpush1.msra.mxu0 0.0
    %468 = vmatprep.subr.mxu0 0.0
    %469 = vmatpush1.msra.mxu0 0.0
    %470 = vmatprep.subr.mxu0 0.0
    %471 = vmatpush1.msra.mxu0 0.0
    %472 = vmatprep.subr.mxu0 0.0
    %473 = vmatpush1.msra.mxu0 0.0
    %474 = vmatprep.subr.mxu0 0.0
    %475 = vmatpush1.msra.mxu0 0.0
    %476 = vmatprep.subr.mxu0 0.0
    %477 = vmatpush1.msra.mxu0 0.0
    %478 = vmatprep.subr.mxu0 0.0
    %479 = vmatpush1.msra.mxu0 0.0
    %480 = vmatprep.subr.mxu0 0.0
    %481 = vmatpush1.msra.mxu0 0.0
    %482 = vmatprep.subr.mxu0 0.0
    %483 = vmatpush1.msra.mxu0 0.0
    %484 = vmatprep.subr.mxu0 0.0
    %485 = vmatpush1.msra.mxu0 0.0
    %486 = vmatprep.subr.mxu0 0.0
    %487 = vmatpush1.msra.mxu0 0.0
    %488 = vmatprep.subr.mxu0 0.0
    %489 = vmatpush1.msra.mxu0 0.0
    %490 = vmatprep.subr.mxu0 0.0
    %491 = vmatpush1.msra.mxu0 0.0
    %492 = vmatprep.subr.mxu0 0.0
    %493 = vmatpush1.msra.mxu0 0.0
    %494 = vmatprep.subr.mxu0 0.0
    %495 = vmatpush1.msra.mxu0 0.0
    %496 = vmatprep.subr.mxu0 0.0
    %497 = vmatpush1.msra.mxu0 0.0
    %498 = vmatprep.subr.mxu0 0.0
    %499 = vmatpush1.msra.mxu0 0.0
    %500 = vmatprep.subr.mxu0 0.0
    %501 = vmatpush1.msra.mxu0 0.0
    %502 = vmatprep.subr.mxu0 0.0
    %503 = vmatpush1.msra.mxu0 0.0
    %504 = vmatprep.subr.mxu0 0.0
    %505 = vmatpush1.msra.mxu0 0.0
    %506 = vmatprep.mubr.f32.mxu0 0.0
    %507 = vmatmul.mubr.f32.gmra.mrb[0].mxu0 %v440
    %v508 = vpop.f32.mrb[0].mxu0
    %v509 = vadd.f32 0.0, %v508
    %v510 = vpop.f32.mrb[0].mxu0
    %511 = vdwg.mxu0
    %v512 = vadd.f32 %v137, %v509
    %v513 = vld [vmem:[%s6] sm:$0xff]
    %515 = vset.pattern.permute.xlu0 0
    %516 = vperm.xlu0 %515, %v513
    %v517 = vpop.permute.xlu0 %516
    %v519 = vadd.f32 %v512, %v517
    %vm520 = vcmask 64512
    %521 = vst.msk [vmem:[#allocation2] sm:$0xff] %vm520, %v519
    // Predicated region
    $region30: #{tpu_custom_call.1} parent=1 // pred_check
      _
    $region31: #{tpu_custom_call.1} parent=1 // pred_check_branch
      %523 = sbr.rel (0) target = $region33
    $region32: #{tpu_custom_call.1} parent=1 // pred_region
      %s525 = ssub.s32 128, 128
      %526 = vsyncadd [#allocation3], %s525
      %s528 = sshll.u32 [#allocation2], 4
      %s529 = int_to_ptr.vmem [resolvable:$true] %s528
      %531 = dma.vmem_to_hbm [thread:$0]  %s529, 128, %s7, [#allocation3]
    $region33: #{tpu_custom_call.1} parent=1 // pred_fallthru
      _
    // Predicated region
    $region34: #{tpu_custom_call.1} parent=1 // pred_check
      _
    $region35: #{tpu_custom_call.1} parent=1 // pred_check_branch
      %533 = sbr.rel (0) target = $region37
    $region36: #{tpu_custom_call.1} parent=1 // pred_region
      %534 = dma.done [#allocation3], 128
    $region37: #{tpu_custom_call.1} parent=1 // pred_fallthru
      _
    %535 = vsyncpa [#allocation3], 1

</llo_original>
